<compile_context>
chip_gen: v5e
topology: v5e:2x2
jax: 0.10.0
libtpu: 0.0.40
codegen_flags: <defaults>
</compile_context>

<pallas_src>
import jax
import jax.numpy as jnp
from jax import lax
from jax.experimental import pallas as pl
from jax.experimental.pallas import tpu as pltpu
import numpy as np


def _ar_loss_kernel(logits_ref, labels_ref, loss_ref, correct_ref):
    # logits_ref: (TM, V) in the input dtype; labels_ref: (TM, 1) int32
    logits = logits_ref[...].astype(jnp.float32)                 # upcast in-kernel
    labels = labels_ref[...]                                      # (TM, 1) int32
    tm, v = logits.shape

    # numerically-stable log-softmax denominator (reduction over vocab/lane axis)
    row_max = jnp.max(logits, axis=-1, keepdims=True)             # (TM, 1)
    lse = row_max + jnp.log(
        jnp.sum(jnp.exp(logits - row_max), axis=-1, keepdims=True))  # (TM, 1)

    # gather the logit at the label index via one-hot select + lane reduce
    vocab_iota = lax.broadcasted_iota(jnp.int32, (tm, v), 1)      # (TM, V)
    label_hit = vocab_iota == labels                               # broadcast (TM, V)
    label_logit = jnp.sum(jnp.where(label_hit, logits, 0.0),
                          axis=-1, keepdims=True)                  # (TM, 1)

    # per-token cross entropy: logsumexp - logit[label]
    loss_ref[...] = lse - label_logit

    # argmax over vocab (first max index on ties)
    is_max = logits == row_max
    argmax_idx = jnp.min(jnp.where(is_max, vocab_iota, v),
                         axis=-1, keepdims=True)                   # (TM, 1)
    correct_ref[...] = (argmax_idx == labels).astype(jnp.float32)


def _choose_row_tile(T, V, itemsize, budget_bytes=12 * 1024 * 1024, cap=1024):
    """Largest multiple-of-8 divisor of T whose double-buffered (tm, V) logits
    tile fits the VMEM budget."""
    per_row = 2 * V * itemsize                    # 2x for double buffering
    max_rows = max(8, budget_bytes // per_row)
    best = None
    for tm in range(8, min(T, cap) + 1, 8):
        if T % tm == 0 and tm <= max_rows:
            best = tm
    if best is None:
        best = 8 if T % 8 == 0 else T             # conservative fallback
    return best


def ar_loss(logits, labels):
    """logits: (B, T+1, V) float (f32 or bf16), labels: (B, T) int -> (loss, dict)."""
    B, S, V = logits.shape
    T = S - 1
    assert labels.shape == (B, T)
    assert T % 8 == 0, "sequence length (T) must be a multiple of 8"

    tm = _choose_row_tile(T, V, jnp.dtype(logits.dtype).itemsize)
    assert T % tm == 0 and tm % 8 == 0

    # labels are tiny (N*4 bytes, ~1/V of the logits traffic); keep them as a
    # small per-tile VMEM block alongside the logits tile.
    labels3 = labels.reshape(B, T, 1).astype(jnp.int32)

    per_loss, per_correct = pl.pallas_call(
        _ar_loss_kernel,
        out_shape=(jax.ShapeDtypeStruct((B, T, 1), jnp.float32),
                   jax.ShapeDtypeStruct((B, T, 1), jnp.float32)),
        grid_spec=pltpu.PrefetchScalarGridSpec(
            num_scalar_prefetch=0,
            grid=(B, T // tm),
            in_specs=[
                # logits: (B, S, V) in-place; seq blocks of size tm over the
                # first T positions -> the last position S-1 is never selected.
                pl.BlockSpec((None, tm, V), lambda b, i: (b, i, 0)),
                pl.BlockSpec((None, tm, 1), lambda b, i: (b, i, 0)),
            ],
            out_specs=[
                pl.BlockSpec((None, tm, 1), lambda b, i: (b, i, 0)),
                pl.BlockSpec((None, tm, 1), lambda b, i: (b, i, 0)),
            ]),
        compiler_params=pltpu.CompilerParams(
            dimension_semantics=("parallel", "parallel"),
            vmem_limit_bytes=32 * 1024 * 1024),
    )(logits, labels3)

    per_loss = per_loss[..., 0]                                    # (B, T)
    per_correct = per_correct[..., 0]                              # (B, T)
    loss = jnp.mean(per_loss)                                      # mean over all tokens
    correct_tokens = per_correct.mean(axis=1).mean()               # per-batch acc -> mean
    return loss, {"loss": loss, "correct_tokens": correct_tokens}


def _reference(logits, labels):
    shift_logits = logits[:, :-1, :].astype(jnp.float32)           # (B, T, V)
    logp = jax.nn.log_softmax(shift_logits, axis=-1)
    nll = -jnp.take_along_axis(logp, labels[..., None], axis=-1)[..., 0]
    loss = nll.mean()
    correct = (jnp.argmax(shift_logits, axis=-1) == labels).astype(jnp.float32)
    return loss, correct.mean(axis=1).mean()


if __name__ == "__main__":
    # synthetic config: codebook_size (vocab) = 512, batch = 2, seq (T) = 16
    key = jax.random.PRNGKey(0)
    k1, k2 = jax.random.split(key)
    B, T, V = 2, 16, 512
    logits = jax.random.normal(k1, (B, T + 1, V), dtype=jnp.float32)
    labels = jax.random.randint(k2, (B, T), 0, V, dtype=jnp.int32)

    # f32 path
    loss, aux = ar_loss(logits, labels)
    jax.block_until_ready((loss, aux))
    ref_loss, ref_acc = _reference(logits, labels)
    np.testing.assert_allclose(np.asarray(loss), np.asarray(ref_loss), rtol=1e-5, atol=1e-5)
    np.testing.assert_allclose(np.asarray(aux["correct_tokens"]),
                               np.asarray(ref_acc), rtol=1e-5, atol=1e-5)

    # bf16 path: logits stay bf16 in HBM, upcast happens inside the kernel
    logits_bf16 = logits.astype(jnp.bfloat16)
    loss_b, aux_b = ar_loss(logits_bf16, labels)
    jax.block_until_ready((loss_b, aux_b))
    ref_loss_b, ref_acc_b = _reference(logits_bf16, labels)
    np.testing.assert_allclose(np.asarray(loss_b), np.asarray(ref_loss_b), rtol=1e-5, atol=1e-5)
    np.testing.assert_allclose(np.asarray(aux_b["correct_tokens"]),
                               np.asarray(ref_acc_b), rtol=1e-5, atol=1e-5)

    print("KERNEL_OK")
</pallas_src>

<mosaic_0001>
module attributes {stable_mosaic.version = 11 : i64} {
  func.func @_ar_loss_kernel(%arg0: i32, %arg1: i32, %arg2: memref<1x16x512xf32, #tpu.memory_space<vmem>>, %arg3: memref<1x16x1xi32, #tpu.memory_space<vmem>>, %arg4: memref<1x16x1xf32, #tpu.memory_space<vmem>>, %arg5: memref<1x16x1xf32, #tpu.memory_space<vmem>>) attributes {dimension_semantics = [#tpu.dimension_semantics<parallel>, #tpu.dimension_semantics<parallel>], iteration_bounds = array<i64: 2, 1>, scalar_prefetch = 0 : i64, scratch_operands = 0 : i64, tpu.core_type = #tpu.core_type<tc>, window_params = [{transform_indices = @transform_0, window_bounds = array<i64: 1, 16, 512>}, {transform_indices = @transform_1, window_bounds = array<i64: 1, 16, 1>}, {transform_indices = @transform_2, window_bounds = array<i64: 1, 16, 1>}, {transform_indices = @transform_3, window_bounds = array<i64: 1, 16, 1>}]} {
    %c0 = arith.constant 0 : index
    %c0_0 = arith.constant 0 : index
    %c0_1 = arith.constant 0 : index
    %0 = vector.load %arg2[%c0, %c0_0, %c0_1] : memref<1x16x512xf32, #tpu.memory_space<vmem>>, vector<1x16x512xf32>
    %1 = vector.shape_cast %0 : vector<1x16x512xf32> to vector<16x512xf32>
    %c0_2 = arith.constant 0 : index
    %c0_3 = arith.constant 0 : index
    %c0_4 = arith.constant 0 : index
    %2 = vector.load %arg3[%c0_2, %c0_3, %c0_4] : memref<1x16x1xi32, #tpu.memory_space<vmem>>, vector<1x16x1xi32>
    %3 = vector.shape_cast %2 : vector<1x16x1xi32> to vector<16x1xi32>
    %cst = arith.constant dense<0xFF800000> : vector<16xf32>
    %4 = vector.multi_reduction <maximumf>, %1, %cst [1] : vector<16x512xf32> to vector<16xf32>
    %5 = vector.shape_cast %4 : vector<16xf32> to vector<16x1xf32>
    %6 = vector.broadcast %5 : vector<16x1xf32> to vector<16x512xf32>
    %7 = arith.subf %1, %6 : vector<16x512xf32>
    %8 = math.exp %7 : vector<16x512xf32>
    %cst_5 = arith.constant dense<0.000000e+00> : vector<16xf32>
    %9 = vector.multi_reduction <add>, %8, %cst_5 [1] : vector<16x512xf32> to vector<16xf32>
    %10 = vector.shape_cast %9 : vector<16xf32> to vector<16x1xf32>
    %11 = math.log %10 : vector<16x1xf32>
    %12 = arith.addf %5, %11 : vector<16x1xf32>
    %13 = tpu.iota {dimensions = array<i32: 1>} : vector<16x512xi32>
    %14 = vector.broadcast %3 : vector<16x1xi32> to vector<16x512xi32>
    %15 = arith.cmpi eq, %13, %14 : vector<16x512xi32>
    %cst_6 = arith.constant 0.000000e+00 : f32
    %16 = vector.broadcast %cst_6 : f32 to vector<16x512xf32>
    %17 = arith.select %15, %1, %16 : vector<16x512xi1>, vector<16x512xf32>
    %cst_7 = arith.constant dense<0.000000e+00> : vector<16xf32>
    %18 = vector.multi_reduction <add>, %17, %cst_7 [1] : vector<16x512xf32> to vector<16xf32>
    %19 = vector.shape_cast %18 : vector<16xf32> to vector<16x1xf32>
    %20 = arith.subf %12, %19 : vector<16x1xf32>
    %c0_8 = arith.constant 0 : index
    %c0_9 = arith.constant 0 : index
    %c0_10 = arith.constant 0 : index
    %21 = vector.load %arg4[%c0_8, %c0_9, %c0_10] : memref<1x16x1xf32, #tpu.memory_space<vmem>>, vector<1x16x1xf32>
    %22 = vector.shape_cast %21 : vector<1x16x1xf32> to vector<16x1xf32>
    %23 = vector.shape_cast %20 : vector<16x1xf32> to vector<1x16x1xf32>
    tpu.vector_store %arg4[%c0_8, %c0_9, %c0_10], %23 {strides = array<i32>} : memref<1x16x1xf32, #tpu.memory_space<vmem>>, vector<1x16x1xf32>,
    %24 = vector.broadcast %5 : vector<16x1xf32> to vector<16x512xf32>
    %25 = arith.cmpf oeq, %1, %24 : vector<16x512xf32>
    %c512_i32 = arith.constant 512 : i32
    %26 = vector.broadcast %c512_i32 : i32 to vector<16x512xi32>
    %27 = arith.select %25, %13, %26 : vector<16x512xi1>, vector<16x512xi32>
    %cst_11 = arith.constant dense<2147483647> : vector<16xi32>
    %28 = vector.multi_reduction <minsi>, %27, %cst_11 [1] : vector<16x512xi32> to vector<16xi32>
    %29 = vector.shape_cast %28 : vector<16xi32> to vector<16x1xi32>
    %30 = arith.cmpi eq, %29, %3 : vector<16x1xi32>
    %31 = arith.extui %30 : vector<16x1xi1> to vector<16x1xi32>
    %32 = arith.sitofp %31 : vector<16x1xi32> to vector<16x1xf32>
    %c0_12 = arith.constant 0 : index
    %c0_13 = arith.constant 0 : index
    %c0_14 = arith.constant 0 : index
    %33 = vector.load %arg5[%c0_12, %c0_13, %c0_14] : memref<1x16x1xf32, #tpu.memory_space<vmem>>, vector<1x16x1xf32>
    %34 = vector.shape_cast %33 : vector<1x16x1xf32> to vector<16x1xf32>
    %35 = vector.shape_cast %32 : vector<16x1xf32> to vector<1x16x1xf32>
    tpu.vector_store %arg5[%c0_12, %c0_13, %c0_14], %35 {strides = array<i32>} : memref<1x16x1xf32, #tpu.memory_space<vmem>>, vector<1x16x1xf32>,
    return
  }
  func.func @transform_0(%arg0: i32, %arg1: i32) -> (i32, i32, i32) {
    %c0_i32 = arith.constant 0 : i32
    %c0_i32_0 = arith.constant 0 : i32
    return %arg0, %arg1, %c0_i32 : i32, i32, i32
  }
  func.func @transform_1(%arg0: i32, %arg1: i32) -> (i32, i32, i32) {
    %c0_i32 = arith.constant 0 : i32
    %c0_i32_0 = arith.constant 0 : i32
    return %arg0, %arg1, %c0_i32 : i32, i32, i32
  }
  func.func @transform_2(%arg0: i32, %arg1: i32) -> (i32, i32, i32) {
    %c0_i32 = arith.constant 0 : i32
    %c0_i32_0 = arith.constant 0 : i32
    return %arg0, %arg1, %c0_i32 : i32, i32, i32
  }
  func.func @transform_3(%arg0: i32, %arg1: i32) -> (i32, i32, i32) {
    %c0_i32 = arith.constant 0 : i32
    %c0_i32_0 = arith.constant 0 : i32
    return %arg0, %arg1, %c0_i32 : i32, i32, i32
  }
}

</mosaic_0001>

<llo_original>
// kernel: tpu_custom_call.1
$region0: #{tpu_custom_call.1}
  #allocation0 [shape = 'u32[]', space=smem, size = 0x4, offset = 0x4, fixed_abs, tag = 'smem constant byte address 0x4 - core index']
  #allocation1 [shape = 'u32[72,128]{1,0:T(1,128)}', space=vmem, size = 0x9000, scoped, tag = 'internal scratch']
  %s0 = inlined_call_operand.vmem [shape: f32[2,17,512], index: 0, kind: input, shape index: {}]
  %s1 = inlined_call_operand.vmem [shape: s32[2,16,1], index: 1, kind: input, shape index: {}]
  %s2 = inlined_call_operand.vmem [shape: f32[2,16,1], index: 2, kind: output, shape index: {0}]
  %s3 = inlined_call_operand.vmem [shape: f32[2,16,1], index: 3, kind: output, shape index: {1}]
  %4 = xla_tuple %s2, %s3
  %s5 = sld [smem:[#allocation0]]
  $region49: #{tpu_custom_call.1} parent=0
    _
  %s7 = ssub.s32 1, %s5
  %s8 = scalar_select 0, %s7, %s5
  loop: start=0, step=1, limit=4
  $region2: #{tpu_custom_call.1} parent=0 // loop_pre_header
    _
  $region3: #{tpu_custom_call.1} parent=0 // loop_header
    %s10 = sphi 0, %s14
    %p11 = scmp.ge.s32.totalorder %s10, 4
    %s17 = sphi 0, %s29
    %s18 = sphi 0, %s25
    %s19 = sphi 0, %s17
    %s20 = sphi 0, %s18
    %s21 = sphi 0, %s19
    %s22 = sphi 0, %s20
    %s34 = sphi 0, %s36
    %s37 = sphi 0, %s34
    %s38 = sphi 0, %s37
    %s54 = sphi 0, %s38
    %s62 = sphi 0, %s64
    %s65 = sphi 0, %s62
    %s66 = sphi 0, %s65
    %s82 = sphi 0, %s66
    %s90 = sphi 0, %s92
    %s93 = sphi 0, %s90
    %s94 = sphi 0, %s93
    %s110 = sphi 0, %s94
    %s118 = sphi 0, %s120
    %s121 = sphi 0, %s118
    %s122 = sphi 0, %s121
    %s138 = sphi 0, %s122
  $region4: #{tpu_custom_call.1} parent=0 // loop_header_branch
    %13 = sbr.rel (%p11) target = $region8
  $region5: #{tpu_custom_call.1} parent=0 // loop_body
    %s15 = ssub.s32 %s10, 1
    %s16 = ssub.s32 %s10, 2
    %s23 = sadd.s32 1, %s18
    %p24 = scmp.ge.s32.totalorder %s23, 1
    %s25 = scalar_select %p24, 0, %s23
    %s26 = sadd.s32 1, %s17
    %s27 = scalar_select %p24, %s26, %s17
    %p28 = scmp.ge.s32.totalorder %s27, 2
    %s29 = scalar_select %p28, 0, %s27
    %s30 = ssub.s32 %s17, %s29
    %s31 = ssub.s32 %s18, %s25
    %s32 = sor.u32 %s30, %s31
    %p33 = scmp.eq.s32.totalorder %s32, 0
    %s35 = sadd.s32 %s34, 1
    %s36 = scalar_select %p33, %s34, %s35
    %p39 = pneg %p33
    %p40 = scmp.eq.s32.totalorder %s10, 1
    %p41 = por %p39, %p40
    %p42 = scmp.ne.s32.totalorder %s34, %s37
    %p43 = scmp.eq.s32.totalorder %s10, 0
    %p44 = por %p42, %p43
    %p45 = scmp.ne.s32.totalorder %s34, %s37
    %p46 = scmp.eq.s32.totalorder %s15, 1
    %p47 = por %p45, %p46
    %p48 = scmp.ne.s32.totalorder %s37, %s38
    %p49 = scmp.eq.s32.totalorder %s15, 0
    %p50 = por %p48, %p49
    %p51 = scmp.ne.s32.totalorder %s37, %s38
    %p52 = scmp.eq.s32.totalorder %s16, 1
    %p53 = por %p51, %p52
    %p55 = scmp.ne.s32.totalorder %s38, %s54
    %p56 = scmp.eq.s32.totalorder %s16, 0
    %p57 = por %p55, %p56
    %s58 = ssub.s32 %s17, %s29
    %s59 = ssub.s32 %s18, %s25
    %s60 = sor.u32 %s58, %s59
    %p61 = scmp.eq.s32.totalorder %s60, 0
    %s63 = sadd.s32 %s62, 1
    %s64 = scalar_select %p61, %s62, %s63
    %p67 = pneg %p61
    %p68 = scmp.eq.s32.totalorder %s10, 1
    %p69 = por %p67, %p68
    %p70 = scmp.ne.s32.totalorder %s62, %s65
    %p71 = scmp.eq.s32.totalorder %s10, 0
    %p72 = por %p70, %p71
    %p73 = scmp.ne.s32.totalorder %s62, %s65
    %p74 = scmp.eq.s32.totalorder %s15, 1
    %p75 = por %p73, %p74
    %p76 = scmp.ne.s32.totalorder %s65, %s66
    %p77 = scmp.eq.s32.totalorder %s15, 0
    %p78 = por %p76, %p77
    %p79 = scmp.ne.s32.totalorder %s65, %s66
    %p80 = scmp.eq.s32.totalorder %s16, 1
    %p81 = por %p79, %p80
    %p83 = scmp.ne.s32.totalorder %s66, %s82
    %p84 = scmp.eq.s32.totalorder %s16, 0
    %p85 = por %p83, %p84
    %s86 = ssub.s32 %s17, %s29
    %s87 = ssub.s32 %s18, %s25
    %s88 = sor.u32 %s86, %s87
    %p89 = scmp.eq.s32.totalorder %s88, 0
    %s91 = sadd.s32 %s90, 1
    %s92 = scalar_select %p89, %s90, %s91
    %p95 = pneg %p89
    %p96 = scmp.eq.s32.totalorder %s10, 1
    %p97 = por %p95, %p96
    %p98 = scmp.ne.s32.totalorder %s90, %s93
    %p99 = scmp.eq.s32.totalorder %s10, 0
    %p100 = por %p98, %p99
    %p101 = scmp.ne.s32.totalorder %s90, %s93
    %p102 = scmp.eq.s32.totalorder %s15, 1
    %p103 = por %p101, %p102
    %p104 = scmp.ne.s32.totalorder %s93, %s94
    %p105 = scmp.eq.s32.totalorder %s15, 0
    %p106 = por %p104, %p105
    %p107 = scmp.ne.s32.totalorder %s93, %s94
    %p108 = scmp.eq.s32.totalorder %s16, 1
    %p109 = por %p107, %p108
    %p111 = scmp.ne.s32.totalorder %s94, %s110
    %p112 = scmp.eq.s32.totalorder %s16, 0
    %p113 = por %p111, %p112
    %s114 = ssub.s32 %s17, %s29
    %s115 = ssub.s32 %s18, %s25
    %s116 = sor.u32 %s114, %s115
    %p117 = scmp.eq.s32.totalorder %s116, 0
    %s119 = sadd.s32 %s118, 1
    %s120 = scalar_select %p117, %s118, %s119
    %p123 = pneg %p117
    %p124 = scmp.eq.s32.totalorder %s10, 1
    %p125 = por %p123, %p124
    %p126 = scmp.ne.s32.totalorder %s118, %s121
    %p127 = scmp.eq.s32.totalorder %s10, 0
    %p128 = por %p126, %p127
    %p129 = scmp.ne.s32.totalorder %s118, %s121
    %p130 = scmp.eq.s32.totalorder %s15, 1
    %p131 = por %p129, %p130
    %p132 = scmp.ne.s32.totalorder %s121, %s122
    %p133 = scmp.eq.s32.totalorder %s15, 0
    %p134 = por %p132, %p133
    %p135 = scmp.ne.s32.totalorder %s121, %s122
    %p136 = scmp.eq.s32.totalorder %s16, 1
    %p137 = por %p135, %p136
    %p139 = scmp.ne.s32.totalorder %s122, %s138
    %p140 = scmp.eq.s32.totalorder %s16, 0
    %p141 = por %p139, %p140
    %p142 = scmp.le.s32.totalorder 1, %s10
    %p143 = scmp.lt.s32.totalorder %s10, 3
    %p144 = pnand %p142, %p143
    %p145 = pneg %p144
    // Predicated region
    $region9: #{tpu_custom_call.1} parent=5 // pred_check
      _
    $region10: #{tpu_custom_call.1} parent=5 // pred_check_branch
      %147 = sbr.rel (%p144) target = $region12
    $region11: #{tpu_custom_call.1} parent=5 // pred_region
      %s148 = ssub.s32 %s10, 1
    $region12: #{tpu_custom_call.1} parent=5 // pred_fallthru
      _
    %p149 = scmp.lt.s32.totalorder %s10, 2
    // Predicated region
    $region13: #{tpu_custom_call.1} parent=5 // pred_check
      %p150 = pneg %p149
    $region14: #{tpu_custom_call.1} parent=5 // pred_check_branch
      %152 = sbr.rel (%p150) target = $region16
    $region15: #{tpu_custom_call.1} parent=5 // pred_region
      // Predicated region
      $region17: #{tpu_custom_call.1} parent=15 // pred_check
        %p153 = pneg %p44
      $region18: #{tpu_custom_call.1} parent=15 // pred_check_branch
        %155 = sbr.rel (%p153) target = $region20
      $region19: #{tpu_custom_call.1} parent=15 // pred_region
        %s156 = smul.u32 2, %s18
        %s157 = ssub.s32 3, %s156
        %p158 = scmp.lt.s32.totalorder %s157, 2
        %s159 = scalar_select %p158, %s157, 2
        %s160 = smul.u32 8, %s159
        %s161 = smul.u32 %s160, 4
        %p162 = scmp.lt.s32.totalorder %s17, 1
        %s163 = scalar_select %p162, %s17, 1
        %p164 = scmp.lt.s32.totalorder %s156, 2
        %s165 = scalar_select %p164, %s156, 2
        %s166 = smul.addr %s165, 4
        %s167 = smul.addr %s163, 12
        %s168 = sadd.s32 %s166, %s167
        %s169 = smul.addr %s168, 8
        %s170 = scalar_lea.vmem %s0, %s169
        %s171 = smul.u32 2, %s18
        %s172 = ssub.s32 3, %s171
        %p173 = scmp.lt.s32.totalorder %s172, 2
        %s174 = scalar_select %p173, %s172, 2
        %s175 = smul.u32 8, %s174
        %s176 = smul.u32 %s175, 4
      $region20: #{tpu_custom_call.1} parent=15 // pred_fallthru
        _
      // Predicated region
      $region21: #{tpu_custom_call.1} parent=15 // pred_check
        %p177 = pneg %p72
      $region22: #{tpu_custom_call.1} parent=15 // pred_check_branch
        %179 = sbr.rel (%p177) target = $region24
      $region23: #{tpu_custom_call.1} parent=15 // pred_region
        %s180 = smul.u32 2, %s18
        %p181 = scmp.lt.s32.totalorder %s17, 1
        %s182 = scalar_select %p181, %s17, 1
        %p183 = scmp.lt.s32.totalorder %s180, 1
        %s184 = scalar_select %p183, %s180, 1
        %s185 = smul.addr %s182, 2
        %s186 = sadd.s32 %s184, %s185
        %s187 = smul.addr %s186, 8
        %s188 = scalar_lea.vmem %s1, %s187
        %s189 = smul.u32 2, %s18
      $region24: #{tpu_custom_call.1} parent=15 // pred_fallthru
        _
    $region16: #{tpu_custom_call.1} parent=5 // pred_fallthru
      _
    %p190 = scmp.le.s32.totalorder 1, %s10
    %p191 = scmp.lt.s32.totalorder %s10, 3
    %p192 = pnand %p190, %p191
    %p193 = pneg %p192
    // Predicated region
    $region25: #{tpu_custom_call.1} parent=5 // pred_check
      _
    $region26: #{tpu_custom_call.1} parent=5 // pred_check_branch
      %195 = sbr.rel (%p192) target = $region28
    $region27: #{tpu_custom_call.1} parent=5 // pred_region
      %s196 = ssub.s32 %s10, 1
      %s197 = smul.u32 2, %s20
      %s198 = ssub.s32 3, %s197
      %p199 = scmp.lt.s32.totalorder %s198, 2
      %s200 = scalar_select %p199, %s198, 2
      %s201 = smul.u32 8, %s200
      %s202 = smul.u32 %s201, 4
      %p203 = scmp.lt.s32.totalorder %s19, 1
      %s204 = scalar_select %p203, %s19, 1
      %p205 = scmp.lt.s32.totalorder %s197, 2
      %s206 = scalar_select %p205, %s197, 2
      %s207 = smul.addr %s206, 4
      %s208 = smul.addr %s204, 12
      %s209 = sadd.s32 %s207, %s208
      %s210 = smul.addr %s209, 8
      %s211 = scalar_lea.vmem %s0, %s210
      %p212 = pneg %p50
      %p213 = pneg %p47
      %s214 = smul.u32 2, %s20
      %p215 = scmp.lt.s32.totalorder %s19, 1
      %s216 = scalar_select %p215, %s19, 1
      %p217 = scmp.lt.s32.totalorder %s214, 1
      %s218 = scalar_select %p217, %s214, 1
      %s219 = smul.addr %s216, 2
      %s220 = sadd.s32 %s218, %s219
      %s221 = smul.addr %s220, 8
      %s222 = scalar_lea.vmem %s1, %s221
      %p223 = pneg %p78
      %p224 = pneg %p75
      %p225 = pneg %p106
      %p226 = pneg %p103
      %s227 = smul.u32 2, %s20
      %p228 = scmp.lt.s32.totalorder %s19, 1
      %s229 = scalar_select %p228, %s19, 1
      %p230 = scmp.lt.s32.totalorder %s227, 1
      %s231 = scalar_select %p230, %s227, 1
      %s232 = smul.addr %s229, 2
      %s233 = sadd.s32 %s231, %s232
      %s234 = smul.addr %s233, 8
      %s235 = scalar_lea.vmem %s2, %s234
      %p236 = pneg %p134
      %p237 = pneg %p131
      %s238 = smul.u32 2, %s20
      %p239 = scmp.lt.s32.totalorder %s19, 1
      %s240 = scalar_select %p239, %s19, 1
      %p241 = scmp.lt.s32.totalorder %s238, 1
      %s242 = scalar_select %p241, %s238, 1
      %s243 = smul.addr %s240, 2
      %s244 = sadd.s32 %s242, %s243
      %s245 = smul.addr %s244, 8
      %s246 = scalar_lea.vmem %s3, %s245
      %s247 = smul.u32 2, %s20
      %s248 = ssub.s32 3, %s247
      %p249 = scmp.lt.s32.totalorder %s248, 2
      %s250 = scalar_select %p249, %s248, 2
      %s251 = smul.u32 8, %s250
      %s252 = smul.u32 %s251, 4
      %p253 = scmp.lt.s32.totalorder %s19, 1
      %s254 = scalar_select %p253, %s19, 1
      %p255 = scmp.lt.s32.totalorder %s247, 2
      %s256 = scalar_select %p255, %s247, 2
      %s257 = smul.addr %s256, 4
      %s258 = smul.addr %s254, 12
      %s259 = sadd.s32 %s257, %s258
      %s260 = smul.addr %s259, 8
      %s261 = scalar_lea.vmem %s0, %s260
      %s262 = smul.u32 2, %s20
      %s263 = ssub.s32 3, %s262
      %p264 = scmp.lt.s32.totalorder %s263, 2
      %s265 = scalar_select %p264, %s263, 2
      %s266 = smul.u32 8, %s265
      %s267 = smul.u32 %s266, 4
      %s268 = smul.u32 2, %s20
      %p269 = scmp.lt.s32.totalorder %s19, 1
      %s270 = scalar_select %p269, %s19, 1
      %p271 = scmp.lt.s32.totalorder %s268, 1
      %s272 = scalar_select %p271, %s268, 1
      %s273 = smul.addr %s270, 2
      %s274 = sadd.s32 %s272, %s273
      %s275 = smul.addr %s274, 8
      %s276 = scalar_lea.vmem %s1, %s275
      %s277 = smul.u32 2, %s20
      %s278 = smul.u32 2, %s20
      %p279 = scmp.lt.s32.totalorder %s19, 1
      %s280 = scalar_select %p279, %s19, 1
      %p281 = scmp.lt.s32.totalorder %s278, 1
      %s282 = scalar_select %p281, %s278, 1
      %s283 = smul.addr %s280, 2
      %s284 = sadd.s32 %s282, %s283
      %s285 = smul.addr %s284, 8
      %s286 = scalar_lea.vmem %s2, %s285
      %s287 = smul.u32 2, %s20
      %s288 = smul.u32 2, %s20
      %p289 = scmp.lt.s32.totalorder %s19, 1
      %s290 = scalar_select %p289, %s19, 1
      %p291 = scmp.lt.s32.totalorder %s288, 1
      %s292 = scalar_select %p291, %s288, 1
      %s293 = smul.addr %s290, 2
      %s294 = sadd.s32 %s292, %s293
      %s295 = smul.addr %s294, 8
      %s296 = scalar_lea.vmem %s3, %s295
      %s297 = smul.u32 2, %s20
      %v298 = vld [vmem:[%s261] sm:$0xff]
      %v299 = vld [vmem:[%s261 + $0x8] sm:$0xff]
      %v300 = vld [vmem:[%s261 + $0x10] sm:$0xff]
      %v301 = vld [vmem:[%s261 + $0x18] sm:$0xff]
      %v302 = vld [vmem:[%s261 + $0x20] sm:$0xff]
      %v303 = vld [vmem:[%s261 + $0x28] sm:$0xff]
      %v304 = vld [vmem:[%s261 + $0x30] sm:$0xff]
      %v305 = vld [vmem:[%s261 + $0x38] sm:$0xff]
      %v306 = vld [vmem:[%s276] sm:$0xff]
      %v307 = vld [vmem:[%s276 + $0x8] sm:$0xff]
      %v308 = vmax.f32 %v298, %v300
      %v309 = vmax.f32 %v299, %v301
      %v310 = vmax.f32 %v308, %v309
      %311 = vmax.xlane.f32.xlu0 %v310
      %v312 = vpop.xlane.xlu0 %311
      %v313 = vmax.f32 %v302, %v304
      %v314 = vmax.f32 %v303, %v305
      %v315 = vmax.f32 %v313, %v314
      %316 = vmax.xlane.f32.xlu0 %v315
      %v317 = vpop.xlane.xlu0 %316
      %v318 = vsub.f32 %v298, %v312
      %v319 = vsub.f32 %v299, %v312
      %v320 = vsub.f32 %v300, %v312
      %v321 = vsub.f32 %v301, %v312
      %v322 = vsub.f32 %v302, %v317
      %v323 = vsub.f32 %v303, %v317
      %v324 = vsub.f32 %v304, %v317
      %v325 = vsub.f32 %v305, %v317
      %v326 = vmul.f32 %v318, 1.442695
      %v327 = vpow.pop %v326
      %v328 = vmul.f32 %v319, 1.442695
      %v329 = vpow.pop %v328
      %v330 = vmul.f32 %v320, 1.442695
      %v331 = vpow.pop %v330
      %v332 = vmul.f32 %v321, 1.442695
      %v333 = vpow.pop %v332
      %v334 = vmul.f32 %v322, 1.442695
      %v335 = vpow.pop %v334
      %v336 = vmul.f32 %v323, 1.442695
      %v337 = vpow.pop %v336
      %v338 = vmul.f32 %v324, 1.442695
      %v339 = vpow.pop %v338
      %v340 = vmul.f32 %v325, 1.442695
      %v341 = vpow.pop %v340
      %v342 = vadd.f32 %v327, %v329
      %v343 = vadd.f32 %v342, %v331
      %v344 = vadd.f32 %v343, %v333
      %345 = vadd.xlane.f32.xlu0 %v344
      %v346 = vpop.xlane.xlu0 %345
      %v347 = vadd.f32 %v335, %v337
      %v348 = vadd.f32 %v347, %v339
      %v349 = vadd.f32 %v348, %v341
      %350 = vadd.xlane.f32.xlu0 %v349
      %v351 = vpop.xlane.xlu0 %350
      %v352 = vlog2.pop %v346
      %v353 = vmul.f32 %v352, 0.6931472
      %v354 = vlog2.pop %v351
      %v355 = vmul.f32 %v354, 0.6931472
      %v356 = vadd.f32 %v312, %v353
      %v357 = vadd.f32 %v317, %v355
      %v358 = vlaneseq
      %v359 = vand.u32 %v358, 127
      %v360 = vadd.s32 %v359, 128
      %v361 = vadd.s32 %v359, 256
      %v362 = vadd.s32 %v359, 384
      %363 = vset.pattern.permute.xlu0 0
      %364 = vperm.xlu0 %363, %v306
      %v365 = vpop.permute.xlu0 %364
      %366 = vset.pattern.permute.xlu0 0
      %367 = vperm.xlu0 %366, %v307
      %v368 = vpop.permute.xlu0 %367
      %vm369 = vcmp.eq.s32.totalorder %v359, %v365
      %vm370 = vcmp.eq.s32.totalorder %v360, %v365
      %vm371 = vcmp.eq.s32.totalorder %v361, %v365
      %vm372 = vcmp.eq.s32.totalorder %v362, %v365
      %vm373 = vcmp.eq.s32.totalorder %v359, %v368
      %vm374 = vcmp.eq.s32.totalorder %v360, %v368
      %vm375 = vcmp.eq.s32.totalorder %v361, %v368
      %vm376 = vcmp.eq.s32.totalorder %v362, %v368
      %v377 = vsel %vm369, %v298, 0.0
      %v378 = vsel %vm370, %v299, 0.0
      %v379 = vsel %vm371, %v300, 0.0
      %v380 = vsel %vm372, %v301, 0.0
      %v381 = vsel %vm373, %v302, 0.0
      %v382 = vsel %vm374, %v303, 0.0
      %v383 = vsel %vm375, %v304, 0.0
      %v384 = vsel %vm376, %v305, 0.0
      %v385 = vadd.f32 %v377, %v378
      %v386 = vadd.f32 %v385, %v379
      %v387 = vadd.f32 %v386, %v380
      %388 = vadd.xlane.f32.xlu0 %v387
      %v389 = vpop.xlane.xlu0 %388
      %v390 = vadd.f32 %v381, %v382
      %v391 = vadd.f32 %v390, %v383
      %v392 = vadd.f32 %v391, %v384
      %393 = vadd.xlane.f32.xlu0 %v392
      %v394 = vpop.xlane.xlu0 %393
      %v395 = vsub.f32 %v356, %v389
      %v396 = vsub.f32 %v357, %v394
      %vm397 = vcmask 7168
      %398 = vst.msk [vmem:[%s286] sm:$0xff] %vm397, %v395
      %399 = vst.msk [vmem:[%s286 + $0x8] sm:$0xff] %vm397, %v396
      %vm400 = vcmp.eq.f32.partialorder %v298, %v312
      %vm401 = vcmp.eq.f32.partialorder %v299, %v312
      %vm402 = vcmp.eq.f32.partialorder %v300, %v312
      %vm403 = vcmp.eq.f32.partialorder %v301, %v312
      %vm404 = vcmp.eq.f32.partialorder %v302, %v317
      %vm405 = vcmp.eq.f32.partialorder %v303, %v317
      %vm406 = vcmp.eq.f32.partialorder %v304, %v317
      %vm407 = vcmp.eq.f32.partialorder %v305, %v317
      %v408 = vsel %vm400, %v359, 512
      %v409 = vsel %vm401, %v360, 512
      %v410 = vsel %vm402, %v361, 512
      %v411 = vsel %vm403, %v362, 512
      %v412 = vsel %vm404, %v359, 512
      %v413 = vsel %vm405, %v360, 512
      %v414 = vsel %vm406, %v361, 512
      %v415 = vsel %vm407, %v362, 512
      %vm416 = vcmp.lt.s32.totalorder %v408, %v410
      %v417 = vsel %vm416, %v408, %v410
      %vm418 = vcmp.lt.s32.totalorder %v409, %v411
      %v419 = vsel %vm418, %v409, %v411
      %vm420 = vcmp.lt.s32.totalorder %v417, %v419
      %v421 = vsel %vm420, %v417, %v419
      %v422 = vand.u32 %v421, 65535
      %v423 = vshra.s32 %v421, 16
      %v424 = vcvt.s32.f32 %v422
      %v425 = vcvt.s32.f32 %v423
      %426 = vmin.xlane.f32.xlu0 %v425
      %v427 = vpop.xlane.xlu0 %426
      %vm428 = vcmp.eq.f32.partialorder %v425, %v427
      %v429 = vsel %vm428, %v424, inf
      %430 = vmin.xlane.f32.xlu0 %v429
      %v431 = vpop.xlane.xlu0 %430
      %v432 = vcvt.f32.s32 %v431
      %v433 = vcvt.f32.s32 %v427
      %v434 = vshll.u32 %v433, 16
      %v435 = vadd.s32 %v434, %v432
      %vm436 = vcmp.lt.s32.totalorder %v412, %v414
      %v437 = vsel %vm436, %v412, %v414
      %vm438 = vcmp.lt.s32.totalorder %v413, %v415
      %v439 = vsel %vm438, %v413, %v415
      %vm440 = vcmp.lt.s32.totalorder %v437, %v439
      %v441 = vsel %vm440, %v437, %v439
      %v442 = vand.u32 %v441, 65535
      %v443 = vshra.s32 %v441, 16
      %v444 = vcvt.s32.f32 %v442
      %v445 = vcvt.s32.f32 %v443
      %446 = vmin.xlane.f32.xlu0 %v445
      %v447 = vpop.xlane.xlu0 %446
      %vm448 = vcmp.eq.f32.partialorder %v445, %v447
      %v449 = vsel %vm448, %v444, inf
      %450 = vmin.xlane.f32.xlu0 %v449
      %v451 = vpop.xlane.xlu0 %450
      %v452 = vcvt.f32.s32 %v451
      %v453 = vcvt.f32.s32 %v447
      %v454 = vshll.u32 %v453, 16
      %v455 = vadd.s32 %v454, %v452
      %vm456 = vcmp.eq.s32.totalorder %v435, %v306
      %vm457 = vcmp.eq.s32.totalorder %v455, %v307
      %v458 = vsel %vm456, 1, 0
      %v459 = vsel %vm457, 1, 0
      %v460 = vcvt.s32.f32 %v458
      %v461 = vcvt.s32.f32 %v459
      %462 = vst.msk [vmem:[%s296] sm:$0xff] %vm397, %v460
      %463 = vst.msk [vmem:[%s296 + $0x8] sm:$0xff] %vm397, %v461
      %s464 = smul.u32 2, %s20
      %p465 = scmp.lt.s32.totalorder %s19, 1
      %s466 = scalar_select %p465, %s19, 1
      %p467 = scmp.lt.s32.totalorder %s464, 1
      %s468 = scalar_select %p467, %s464, 1
      %s469 = smul.addr %s466, 2
      %s470 = sadd.s32 %s468, %s469
      %s471 = smul.addr %s470, 8
      %s472 = scalar_lea.vmem %s2, %s471
      %s473 = smul.u32 2, %s20
      %p474 = scmp.lt.s32.totalorder %s19, 1
      %s475 = scalar_select %p474, %s19, 1
      %p476 = scmp.lt.s32.totalorder %s473, 1
      %s477 = scalar_select %p476, %s473, 1
      %s478 = smul.addr %s475, 2
      %s479 = sadd.s32 %s477, %s478
      %s480 = smul.addr %s479, 8
      %s481 = scalar_lea.vmem %s3, %s480
      // Predicated region
      $region29: #{tpu_custom_call.1} parent=27 // pred_check
        %p482 = pneg %p103
      $region30: #{tpu_custom_call.1} parent=27 // pred_check_branch
        %484 = sbr.rel (%p482) target = $region32
      $region31: #{tpu_custom_call.1} parent=27 // pred_region
        %s485 = smul.u32 2, %s20
      $region32: #{tpu_custom_call.1} parent=27 // pred_fallthru
        _
      // Predicated region
      $region33: #{tpu_custom_call.1} parent=27 // pred_check
        %p486 = pneg %p131
      $region34: #{tpu_custom_call.1} parent=27 // pred_check_branch
        %488 = sbr.rel (%p486) target = $region36
      $region35: #{tpu_custom_call.1} parent=27 // pred_region
        %s489 = smul.u32 2, %s20
      $region36: #{tpu_custom_call.1} parent=27 // pred_fallthru
        _
    $region28: #{tpu_custom_call.1} parent=5 // pred_fallthru
      _
    %p490 = scmp.le.s32.totalorder 2, %s10
    // Predicated region
    $region37: #{tpu_custom_call.1} parent=5 // pred_check
      %p491 = pneg %p490
    $region38: #{tpu_custom_call.1} parent=5 // pred_check_branch
      %493 = sbr.rel (%p491) target = $region40
    $region39: #{tpu_custom_call.1} parent=5 // pred_region
      %s494 = ssub.s32 %s10, 2
      // Predicated region
      $region41: #{tpu_custom_call.1} parent=39 // pred_check
        %p495 = pneg %p109
      $region42: #{tpu_custom_call.1} parent=39 // pred_check_branch
        %497 = sbr.rel (%p495) target = $region44
      $region43: #{tpu_custom_call.1} parent=39 // pred_region
        %s498 = smul.u32 2, %s22
        %p499 = scmp.lt.s32.totalorder %s21, 1
        %s500 = scalar_select %p499, %s21, 1
        %p501 = scmp.lt.s32.totalorder %s498, 1
        %s502 = scalar_select %p501, %s498, 1
        %s503 = smul.addr %s500, 2
        %s504 = sadd.s32 %s502, %s503
        %s505 = smul.addr %s504, 8
        %s506 = scalar_lea.vmem %s2, %s505
      $region44: #{tpu_custom_call.1} parent=39 // pred_fallthru
        _
      // Predicated region
      $region45: #{tpu_custom_call.1} parent=39 // pred_check
        %p507 = pneg %p137
      $region46: #{tpu_custom_call.1} parent=39 // pred_check_branch
        %509 = sbr.rel (%p507) target = $region48
      $region47: #{tpu_custom_call.1} parent=39 // pred_region
        %s510 = smul.u32 2, %s22
        %p511 = scmp.lt.s32.totalorder %s21, 1
        %s512 = scalar_select %p511, %s21, 1
        %p513 = scmp.lt.s32.totalorder %s510, 1
        %s514 = scalar_select %p513, %s510, 1
        %s515 = smul.addr %s512, 2
        %s516 = sadd.s32 %s514, %s515
        %s517 = smul.addr %s516, 8
        %s518 = scalar_lea.vmem %s3, %s517
      $region48: #{tpu_custom_call.1} parent=39 // pred_fallthru
        _
    $region40: #{tpu_custom_call.1} parent=5 // pred_fallthru
      _
  $region6: #{tpu_custom_call.1} parent=0 // loop_footer
    %s14 = sadd.s32 1, %s10
  $region7: #{tpu_custom_call.1} parent=0 // loop_footer_branch
    %9 = sbr.rel target = $region3
  $region8: #{tpu_custom_call.1} parent=0 // loop_exit
    _

</llo_original>
